<compile_context>
chip_gen: v7x
topology: tpu7x:2x2x1
jax: 0.10.0
libtpu: 0.0.40
codegen_flags: <defaults>
</compile_context>

<pallas_src>
import jax
import jax.numpy as jnp
from jax.experimental import pallas as pl
from jax.experimental.pallas import tpu as pltpu

BN_EPS = 1e-5
BOUND_ALPHA = (-0.3, 0.3)
BOUND_LABDA = (0.01, 18.0)

_LANE = 128


def _cdiv(a, b):
    return (a + b - 1) // b


def _round_up(a, b):
    return _cdiv(a, b) * b


# ---------------------------------------------------------------------------
# Kernels
# ---------------------------------------------------------------------------
def _fused_kernel(x_ref, pv_ref, b2_ref, out_ref):
    """Resident path: whole x in one VMEM block, read once from HBM.

    x_ref  : (8, N)  features on sublanes, batch on lanes (unpadded)
    pv_ref : (8, 4)  columns = [gamma, beta, w_alpha, w_labda]
    b2_ref : (2, 1)  rows    = [b_alpha, b_labda]
    out_ref: (2, N)  rows    = [alpha, labda]
    """
    x = x_ref[...]
    pv = pv_ref[...]
    gamma, beta = pv[:, 0:1], pv[:, 1:2]
    wa, wl = pv[:, 2:3], pv[:, 3:4]

    mean = jnp.mean(x, axis=1, keepdims=True)                      # (8, 1)
    ctr = x - mean
    var = jnp.mean(ctr * ctr, axis=1, keepdims=True)               # centered: no cancellation
    scale = jax.lax.rsqrt(var + BN_EPS) * gamma                    # (8, 1)
    xn = ctr * scale + beta                                        # (8, N)

    a = jnp.sum(xn * wa, axis=0, keepdims=True) + b2_ref[0:1, :]   # (1, N)
    l = jnp.sum(xn * wl, axis=0, keepdims=True) + b2_ref[1:2, :]   # (1, N)
    out_ref[0:1, :] = jnp.clip(jnp.tanh(a), BOUND_ALPHA[0], BOUND_ALPHA[1])
    out_ref[1:2, :] = jnp.clip(jnp.maximum(l, 0.0), BOUND_LABDA[0], BOUND_LABDA[1])


def _stats_kernel(x_ref, stats_ref):
    """Streaming pass 1: accumulate per-feature sum / sum-of-squares.

    x_ref    : (8, tile_n)  zero-padded lanes contribute nothing
    stats_ref: (8, 2)       resident accumulator output (col 0 = sum, 1 = sumsq)
    """
    @pl.when(pl.program_id(0) == 0)
    def _init():
        stats_ref[...] = jnp.zeros_like(stats_ref)

    x = x_ref[...]
    stats_ref[:, 0:1] += jnp.sum(x, axis=1, keepdims=True)
    stats_ref[:, 1:2] += jnp.sum(x * x, axis=1, keepdims=True)


def _apply_kernel(x_ref, w_ref, b_ref, out_ref):
    """Streaming pass 2: BN already folded into w_ref/b_ref by the wrapper.

    x_ref  : (8, tile_n)
    w_ref  : (8, 2)   folded head weights (col 0 = alpha, col 1 = labda)
    b_ref  : (2, 1)   folded head biases
    out_ref: (2, tile_n)  lane-dense fused output, rows written directly
    """
    x = x_ref[...]
    a = jnp.sum(x * w_ref[:, 0:1], axis=0, keepdims=True) + b_ref[0:1, :]
    l = jnp.sum(x * w_ref[:, 1:2], axis=0, keepdims=True) + b_ref[1:2, :]
    out_ref[0:1, :] = jnp.clip(jnp.tanh(a), BOUND_ALPHA[0], BOUND_ALPHA[1])
    out_ref[1:2, :] = jnp.clip(jnp.maximum(l, 0.0), BOUND_LABDA[0], BOUND_LABDA[1])


# ---------------------------------------------------------------------------
# Wrapper
# ---------------------------------------------------------------------------
def mlp_1_1_forward(x, params, *, max_tile_n=65536, resident_max_n=32768):
    """x: (N, 1, 8) float32.  Returns (alpha, labda), each (N, 1) float32."""
    assert max_tile_n % _LANE == 0 and max_tile_n >= _LANE

    x2 = jnp.squeeze(x, axis=1).astype(jnp.float32)        # (N, 8)
    N = x2.shape[0]
    xt = x2.T                                              # (8, N): batch -> lanes

    pv = jnp.concatenate(
        [params["gamma"], params["beta"], params["w_alpha"], params["w_labda"]],
        axis=1).astype(jnp.float32)                        # (8, 4)
    b2 = jnp.concatenate(
        [params["b_alpha"], params["b_labda"]]).reshape(2, 1).astype(jnp.float32)

    # ---- Resident path: x read from HBM exactly once, centered-variance BN.
    if N <= resident_max_n:
        out = pl.pallas_call(
            _fused_kernel,
            out_shape=jax.ShapeDtypeStruct((2, N), jnp.float32),
        )(xt, pv, b2)
        return out[0, :].reshape(N, 1), out[1, :].reshape(N, 1)

    # ---- Streaming path: big lane tiles, tiny tile-granule padding only.
    n_pad0 = _round_up(N, _LANE)
    num_tiles = _cdiv(n_pad0, max_tile_n)
    tile_n = _round_up(_cdiv(n_pad0, num_tiles), _LANE)    # all blocks full-size
    n_pad = num_tiles * tile_n                             # pad < 128*num_tiles lanes
    xt = jnp.pad(xt, ((0, 0), (0, n_pad - N)))             # zeros: stats-safe

    # Pass 1: per-feature moments (sequential accumulator over the grid).
    stats = pl.pallas_call(
        _stats_kernel,
        out_shape=jax.ShapeDtypeStruct((8, 2), jnp.float32),
        grid_spec=pltpu.PrefetchScalarGridSpec(
            num_scalar_prefetch=0,
            grid=(num_tiles,),
            in_specs=[pl.BlockSpec((8, tile_n), lambda t: (0, t))],
            out_specs=pl.BlockSpec((8, 2), lambda t: (0, 0)),
        ),
        compiler_params=pltpu.CompilerParams(
            dimension_semantics=("arbitrary",)),
    )(xt)

    # Fold BatchNorm into the head weights (tiny XLA; divides by the true N,
    # so the zero-padded lanes never affect the statistics).
    mean = stats[:, 0] / N                                               # (8,)
    var = jnp.maximum(stats[:, 1] / N - mean * mean, 0.0)                # biased var, clamped >= 0
    scale = jax.lax.rsqrt(var + BN_EPS) * pv[:, 0]                       # gamma * inv_std
    shift = pv[:, 1] - mean * scale                                      # beta - mean*scale
    w = pv[:, 2:4]                                                       # (8, 2)
    w_eff = (w * scale[:, None]).astype(jnp.float32)                     # (8, 2)
    b_eff = (b2[:, 0] + shift @ w).reshape(2, 1).astype(jnp.float32)     # (2, 1)

    # Pass 2: apply - independent tiles, megacore-shardable on v7x.
    out = pl.pallas_call(
        _apply_kernel,
        out_shape=jax.ShapeDtypeStruct((2, n_pad), jnp.float32),
        grid_spec=pltpu.PrefetchScalarGridSpec(
            num_scalar_prefetch=0,
            grid=(num_tiles,),
            in_specs=[pl.BlockSpec((8, tile_n), lambda t: (0, t)),
                      pl.BlockSpec((8, 2), lambda t: (0, 0)),
                      pl.BlockSpec((2, 1), lambda t: (0, 0))],
            out_specs=pl.BlockSpec((2, tile_n), lambda t: (0, t)),
        ),
        compiler_params=pltpu.CompilerParams(
            dimension_semantics=("parallel",)),
    )(xt, w_eff, b_eff)

    return out[0, :N].reshape(N, 1), out[1, :N].reshape(N, 1)


# ---------------------------------------------------------------------------
# Params / reference / self-test
# ---------------------------------------------------------------------------
def init_params(key):
    """Matches the PyTorch module's parameter shapes.

    BatchNorm1d(8): gamma=1, beta=0 (defaults).  Linear(8,1): weight stored
    transposed as (8,1); weight/bias ~ U(-1/sqrt(8), 1/sqrt(8)).
    """
    k1, k2, k3, k4 = jax.random.split(key, 4)
    bound = 1.0 / jnp.sqrt(8.0)
    return {
        "gamma": jnp.ones((8, 1), jnp.float32),
        "beta": jnp.zeros((8, 1), jnp.float32),
        "w_alpha": jax.random.uniform(k1, (8, 1), jnp.float32, -bound, bound),
        "b_alpha": jax.random.uniform(k2, (1,), jnp.float32, -bound, bound),
        "w_labda": jax.random.uniform(k3, (8, 1), jnp.float32, -bound, bound),
        "b_labda": jax.random.uniform(k4, (1,), jnp.float32, -bound, bound),
    }


def _reference(x, params):
    """Pure-JAX reference of the PyTorch forward (training-mode BN)."""
    x2 = jnp.squeeze(x, axis=1)
    mean = jnp.mean(x2, axis=0, keepdims=True)
    var = jnp.mean((x2 - mean) ** 2, axis=0, keepdims=True)
    xn = (x2 - mean) / jnp.sqrt(var + BN_EPS) * params["gamma"].T + params["beta"].T
    a = jnp.tanh(xn @ params["w_alpha"] + params["b_alpha"])
    l = jnp.maximum(xn @ params["w_labda"] + params["b_labda"], 0.0)
    return jnp.clip(a, *BOUND_ALPHA), jnp.clip(l, *BOUND_LABDA)


if __name__ == "__main__":
    key = jax.random.PRNGKey(0)
    kp, kx1, kx2, kx3 = jax.random.split(key, 4)
    params = init_params(kp)

    fwd_resident = jax.jit(lambda x: mlp_1_1_forward(x, params))
    fwd_stream = jax.jit(lambda x: mlp_1_1_forward(
        x, params, max_tile_n=256, resident_max_n=0))   # force multi-tile streaming

    cases = [
        (kx1, 8, fwd_resident),    # tiny batch, resident fused kernel
        (kx2, 600, fwd_resident),  # resident path, non-multiple-of-128 batch
        (kx3, 600, fwd_stream),    # streaming path: 3 tiles, gridded stats + apply
    ]
    for kx, n, fwd in cases:
        x = jax.random.normal(kx, (n, 1, 8), jnp.float32)   # PyTorch-style (N, 1, 8)
        alpha, labda = jax.block_until_ready(fwd(x))

        ref_alpha, ref_labda = _reference(x, params)
        assert alpha.shape == (n, 1) and labda.shape == (n, 1)
        assert jnp.allclose(alpha, ref_alpha, atol=1e-4), \
            float(jnp.max(jnp.abs(alpha - ref_alpha)))
        assert jnp.allclose(labda, ref_labda, atol=1e-4), \
            float(jnp.max(jnp.abs(labda - ref_labda)))

    print("KERNEL_OK")
</pallas_src>

<mosaic_0001>
module attributes {stable_mosaic.version = 11 : i64} {
  func.func @_fused_kernel(%arg0: memref<8x8xf32, #tpu.memory_space<vmem>>, %arg1: memref<8x4xf32, #tpu.memory_space<vmem>>, %arg2: memref<2x1xf32, #tpu.memory_space<vmem>>, %arg3: memref<2x8xf32, #tpu.memory_space<vmem>>) attributes {dimension_semantics = [], scalar_prefetch = 0 : i64, scratch_operands = 0 : i64, tpu.core_type = #tpu.core_type<tc>} {
    %c0 = arith.constant 0 : index
    %c0_0 = arith.constant 0 : index
    %0 = vector.load %arg0[%c0, %c0_0] : memref<8x8xf32, #tpu.memory_space<vmem>>, vector<8x8xf32>
    %c0_1 = arith.constant 0 : index
    %c0_2 = arith.constant 0 : index
    %1 = vector.load %arg1[%c0_1, %c0_2] : memref<8x4xf32, #tpu.memory_space<vmem>>, vector<8x4xf32>
    %2 = vector.extract_strided_slice %1 {offsets = [0, 0], sizes = [8, 1], strides = [1, 1]} : vector<8x4xf32> to vector<8x1xf32>
    %3 = vector.extract_strided_slice %1 {offsets = [0, 1], sizes = [8, 1], strides = [1, 1]} : vector<8x4xf32> to vector<8x1xf32>
    %4 = vector.extract_strided_slice %1 {offsets = [0, 2], sizes = [8, 1], strides = [1, 1]} : vector<8x4xf32> to vector<8x1xf32>
    %5 = vector.extract_strided_slice %1 {offsets = [0, 3], sizes = [8, 1], strides = [1, 1]} : vector<8x4xf32> to vector<8x1xf32>
    %cst = arith.constant dense<0.000000e+00> : vector<8xf32>
    %6 = vector.multi_reduction <add>, %0, %cst [1] : vector<8x8xf32> to vector<8xf32>
    %7 = vector.shape_cast %6 : vector<8xf32> to vector<8x1xf32>
    %cst_3 = arith.constant 8.000000e+00 : f32
    %8 = vector.broadcast %cst_3 : f32 to vector<8x1xf32>
    %9 = arith.divf %7, %8 : vector<8x1xf32>
    %10 = vector.broadcast %9 : vector<8x1xf32> to vector<8x8xf32>
    %11 = arith.subf %0, %10 : vector<8x8xf32>
    %12 = arith.mulf %11, %11 : vector<8x8xf32>
    %cst_4 = arith.constant dense<0.000000e+00> : vector<8xf32>
    %13 = vector.multi_reduction <add>, %12, %cst_4 [1] : vector<8x8xf32> to vector<8xf32>
    %14 = vector.shape_cast %13 : vector<8xf32> to vector<8x1xf32>
    %cst_5 = arith.constant 8.000000e+00 : f32
    %15 = vector.broadcast %cst_5 : f32 to vector<8x1xf32>
    %16 = arith.divf %14, %15 : vector<8x1xf32>
    %cst_6 = arith.constant 9.99999974E-6 : f32
    %17 = vector.broadcast %cst_6 : f32 to vector<8x1xf32>
    %18 = arith.addf %16, %17 : vector<8x1xf32>
    %19 = math.rsqrt %18 : vector<8x1xf32>
    %20 = arith.mulf %19, %2 : vector<8x1xf32>
    %21 = vector.broadcast %20 : vector<8x1xf32> to vector<8x8xf32>
    %22 = arith.mulf %11, %21 : vector<8x8xf32>
    %23 = vector.broadcast %3 : vector<8x1xf32> to vector<8x8xf32>
    %24 = arith.addf %22, %23 : vector<8x8xf32>
    %25 = vector.broadcast %4 : vector<8x1xf32> to vector<8x8xf32>
    %26 = arith.mulf %24, %25 : vector<8x8xf32>
    %cst_7 = arith.constant dense<0.000000e+00> : vector<8xf32>
    %27 = vector.multi_reduction <add>, %26, %cst_7 [0] : vector<8x8xf32> to vector<8xf32>
    %28 = vector.shape_cast %27 : vector<8xf32> to vector<1x8xf32>
    %c0_8 = arith.constant 0 : index
    %c0_9 = arith.constant 0 : index
    %29 = vector.load %arg2[%c0_8, %c0_9] : memref<2x1xf32, #tpu.memory_space<vmem>>, vector<1x1xf32>
    %30 = vector.broadcast %29 : vector<1x1xf32> to vector<1x8xf32>
    %31 = arith.addf %28, %30 : vector<1x8xf32>
    %32 = vector.broadcast %5 : vector<8x1xf32> to vector<8x8xf32>
    %33 = arith.mulf %24, %32 : vector<8x8xf32>
    %cst_10 = arith.constant dense<0.000000e+00> : vector<8xf32>
    %34 = vector.multi_reduction <add>, %33, %cst_10 [0] : vector<8x8xf32> to vector<8xf32>
    %35 = vector.shape_cast %34 : vector<8xf32> to vector<1x8xf32>
    %c1 = arith.constant 1 : index
    %c0_11 = arith.constant 0 : index
    %36 = vector.load %arg2[%c1, %c0_11] : memref<2x1xf32, #tpu.memory_space<vmem>>, vector<1x1xf32>
    %37 = vector.broadcast %36 : vector<1x1xf32> to vector<1x8xf32>
    %38 = arith.addf %35, %37 : vector<1x8xf32>
    %39 = math.tanh %31 : vector<1x8xf32>
    %cst_12 = arith.constant -3.000000e-01 : f32
    %cst_13 = arith.constant 3.000000e-01 : f32
    %40 = vector.broadcast %cst_12 : f32 to vector<1x8xf32>
    %41 = arith.maximumf %40, %39 : vector<1x8xf32>
    %42 = vector.broadcast %cst_13 : f32 to vector<1x8xf32>
    %43 = arith.minimumf %42, %41 : vector<1x8xf32>
    %c0_14 = arith.constant 0 : index
    %c0_15 = arith.constant 0 : index
    %44 = vector.load %arg3[%c0_14, %c0_15] : memref<2x8xf32, #tpu.memory_space<vmem>>, vector<1x8xf32>
    tpu.vector_store %arg3[%c0_14, %c0_15], %43 {strides = array<i32>} : memref<2x8xf32, #tpu.memory_space<vmem>>, vector<1x8xf32>,
    %cst_16 = arith.constant 0.000000e+00 : f32
    %45 = vector.broadcast %cst_16 : f32 to vector<1x8xf32>
    %46 = arith.maximumf %38, %45 : vector<1x8xf32>
    %cst_17 = arith.constant 0.00999999977 : f32
    %cst_18 = arith.constant 1.800000e+01 : f32
    %47 = vector.broadcast %cst_17 : f32 to vector<1x8xf32>
    %48 = arith.maximumf %47, %46 : vector<1x8xf32>
    %49 = vector.broadcast %cst_18 : f32 to vector<1x8xf32>
    %50 = arith.minimumf %49, %48 : vector<1x8xf32>
    %c1_19 = arith.constant 1 : index
    %c0_20 = arith.constant 0 : index
    %51 = vector.load %arg3[%c1_19, %c0_20] : memref<2x8xf32, #tpu.memory_space<vmem>>, vector<1x8xf32>
    tpu.vector_store %arg3[%c1_19, %c0_20], %50 {strides = array<i32>} : memref<2x8xf32, #tpu.memory_space<vmem>>, vector<1x8xf32>,
    return
  }
}

</mosaic_0001>

<llo_original>
// kernel: _lambda_.1
$region0: #{_lambda_.1}
  #allocation0 [shape = 'u32[]', space=smem, size = 0x4, offset = 0x4, fixed_abs, tag = 'smem constant byte address 0x4 - core index']
  #allocation1 [shape = 'u32[144,128]{1,0:T(1,128)}', space=vmem, size = 0x12000, scoped, tag = 'internal scratch']
  %s0 = inlined_call_operand.vmem [shape: f32[8,8], index: 0, kind: input, shape index: {}]
  %s1 = inlined_call_operand.vmem [shape: f32[8,4], index: 1, kind: input, shape index: {}]
  %s2 = inlined_call_operand.vmem [shape: f32[2,1], index: 2, kind: input, shape index: {}]
  %s3 = inlined_call_operand.vmem [shape: f32[2,8], index: 3, kind: output, shape index: {}]
  %s4 = sld [smem:[#allocation0]]
  $region22: #{_lambda_.1} parent=0
    _
  %s6 = ssub.s32 1, %s4
  %s7 = scalar_select 0, %s6, %s4
  // Predicated region
  $region2: #{_lambda_.1} parent=0 // pred_check
    _
  $region3: #{_lambda_.1} parent=0 // pred_check_branch
    %9 = sbr.rel (0) target = $region5
  $region4: #{_lambda_.1} parent=0 // pred_region
    _
  $region5: #{_lambda_.1} parent=0 // pred_fallthru
    _
  // Predicated region
  $region6: #{_lambda_.1} parent=0 // pred_check
    _
  $region7: #{_lambda_.1} parent=0 // pred_check_branch
    %11 = sbr.rel (0) target = $region9
  $region8: #{_lambda_.1} parent=0 // pred_region
    _
  $region9: #{_lambda_.1} parent=0 // pred_fallthru
    _
  // Predicated region
  $region10: #{_lambda_.1} parent=0 // pred_check
    _
  $region11: #{_lambda_.1} parent=0 // pred_check_branch
    %13 = sbr.rel (0) target = $region13
  $region12: #{_lambda_.1} parent=0 // pred_region
    _
  $region13: #{_lambda_.1} parent=0 // pred_fallthru
    _
  %v14 = vld [vmem:[%s0] sm:$0xff]
  %v15 = vld [vmem:[%s1] sm:$0xff]
  %vm16 = vcmask 64512
  %v17 = vsel %vm16, %v14, 0.0
  %18 = vadd.xlane.f32.xlu0 %v17
  %v19 = vpop.xlane.xlu0 %18
  %v20 = vrcp.pop 8.0
  %v21 = vmul.f32 %v19, %v20
  %v22 = vsub.f32 %v14, %v21
  %v23 = vmul.f32 %v22, %v22
  %v24 = vsel %vm16, %v23, 0.0
  %25 = vadd.xlane.f32.xlu0 %v24
  %v26 = vpop.xlane.xlu0 %25
  %v27 = vmul.f32 %v26, %v20
  %v28 = vadd.f32 %v27, 1e-05
  %v29 = vrsqrt.pop %v28
  %v30 = vmul.f32 %v29, %v15
  %32 = vset.pattern.permute.xlu0 0
  %33 = vperm.xlu0 %32, %v30
  %v34 = vpop.permute.xlu0 %33
  %v36 = vmul.f32 %v22, %v34
  %38 = vset.pattern.permute.xlu0 1
  %39 = vperm.xlu0 %38, %v15
  %v40 = vpop.permute.xlu0 %39
  %v42 = vadd.f32 %v36, %v40
  %43 = vset.pattern.permute.xlu0 2
  %44 = vperm.xlu0 %43, %v15
  %v45 = vpop.permute.xlu0 %44
  %v47 = vmul.f32 %v42, %v45
  %v48 = vsel %vm16, %v47, 0.0
  %v49 = vrot.slane %v48, 4
  %v50 = vadd.f32 %v48, %v49
  %v51 = vrot.slane %v50, 2
  %v52 = vadd.f32 %v50, %v51
  %v53 = vrot.slane %v52, 1
  %v54 = vadd.f32 %v52, %v53
  %v55 = vld [vmem:[%s2] sm:$0x1]
  %57 = vset.pattern.permute.xlu0 0
  %58 = vperm.xlu0 %57, %v55
  %v59 = vpop.permute.xlu0 %58
  %v61 = vadd.f32 %v54, %v59
  %62 = vset.pattern.permute.xlu0 3
  %63 = vperm.xlu0 %62, %v15
  %v64 = vpop.permute.xlu0 %63
  %v66 = vmul.f32 %v42, %v64
  %v67 = vsel %vm16, %v66, 0.0
  %v68 = vrot.slane %v67, 4
  %v69 = vadd.f32 %v67, %v68
  %v70 = vrot.slane %v69, 2
  %v71 = vadd.f32 %v69, %v70
  %v72 = vrot.slane %v71, 1
  %v73 = vadd.f32 %v71, %v72
  %v74 = vld [vmem:[%s2 + $0x1] sm:$0x1]
  %76 = vset.pattern.permute.xlu0 0
  %77 = vperm.xlu0 %76, %v74
  %v78 = vpop.permute.xlu0 %77
  %v80 = vadd.f32 %v73, %v78
  %v81 = vtanh.pop %v61
  %v82 = vmax.f32 %v81, -0.3
  %v83 = vmin.f32 %v82, 0.3
  %vm84 = vcmask 57344
  %85 = vst.msk [vmem:[%s3] sm:$0x1] %vm84, %v83
  %v86 = vmax.f32 %v80, 0.0
  %v87 = vmax.f32 %v86, 0.01
  %v88 = vmin.f32 %v87, 18.0
  %89 = vst.msk [vmem:[%s3 + $0x1] sm:$0x1] %vm84, %v88
  // Predicated region
  $region14: #{_lambda_.1} parent=0 // pred_check
    _
  $region15: #{_lambda_.1} parent=0 // pred_check_branch
    %91 = sbr.rel (0) target = $region17
  $region16: #{_lambda_.1} parent=0 // pred_region
    _
  $region17: #{_lambda_.1} parent=0 // pred_fallthru
    _
  // Predicated region
  $region18: #{_lambda_.1} parent=0 // pred_check
    _
  $region19: #{_lambda_.1} parent=0 // pred_check_branch
    %93 = sbr.rel (0) target = $region21
  $region20: #{_lambda_.1} parent=0 // pred_region
    _
  $region21: #{_lambda_.1} parent=0 // pred_fallthru
    _

</llo_original>
